<compile_context>
chip_gen: v7x
topology: tpu7x:2x2x1
jax: 0.10.0
libtpu: 0.0.40
codegen_flags: <defaults>
</compile_context>

<pallas_src>
import jax
import jax.numpy as jnp
from jax.experimental import pallas as pl
from jax.experimental.pallas import tpu as pltpu


def _silu(x):
    return x * jax.nn.sigmoid(x)


def _round_up(n, m):
    return -(-n // m) * m


# ---------------------------------------------------------------------------
# Kernel
# ---------------------------------------------------------------------------
def policy_value_kernel(
    x_ref,                     # bf16 activations [TB, in_pad] = concat(obs, hidden) padded
    w_in_ref,                  # bf16 fused (obs|hidden)->core projection [in_pad, W]
    w_c1_ref, w_c2_ref,        # bf16 core MLP weights [W, W]
    w_head_ref,                # bf16 fused (policy|value) head [W, W]
    b_ref,                     # f32 packed biases [8, W]: rows 0..3 = (proj, c1, c2, head)
    head_ref,                  # f32 output [TB, W]; cols [0:A]=logits, [A]=value
):
    f32 = jnp.float32
    bf16 = jnp.bfloat16

    b = b_ref[...]

    # Pre-folded (obs_proj, hidden_proj, concat_proj) chain: ONE MXU pass -> core.
    x = jnp.dot(x_ref[...], w_in_ref[...], preferred_element_type=f32) + b[0:1]

    # core_model: 2-layer MLP. Matmul inputs bf16, accumulation + SiLU in f32.
    h = _silu(jnp.dot(x.astype(bf16), w_c1_ref[...], preferred_element_type=f32) + b[1:2])
    h = _silu(jnp.dot(h.astype(bf16), w_c2_ref[...], preferred_element_type=f32) + b[2:3])

    # Fused policy_head + value_head: single lane-dense matmul.
    head_ref[...] = (
        jnp.dot(h.astype(bf16), w_head_ref[...], preferred_element_type=f32) + b[3:4]
    ).astype(head_ref.dtype)


# ---------------------------------------------------------------------------
# Parameter prep (done once, outside the per-step call)
# ---------------------------------------------------------------------------
def prepare_params(p, action_dim):
    """Fold/fuse/pad/cast raw Linear params into the kernel's operand set."""
    f32 = jnp.float32
    bf16 = jnp.bfloat16

    obs_dim, embed_dim = p["w_op"].shape
    fd_dim = p["w_hp"].shape[0]
    core_dim = p["w_c1"].shape[0]

    w_cat_top = p["w_cat"][:embed_dim]
    w_cat_bot = p["w_cat"][embed_dim:]

    # Pre-compose the linear chain obs->embed->core and hidden->embed->core,
    # then stack so the kernel sees a single matmul over concat(obs, hidden).
    w_in_eff = jnp.concatenate(
        [p["w_op"] @ w_cat_top, p["w_hp"] @ w_cat_bot], axis=0)             # [obs+fd, core]
    b_x = p["b_op"] @ w_cat_top + p["b_hp"] @ w_cat_bot + p["b_cat"]        # [1, core]

    # Fuse policy + value heads into one matmul.
    w_head = jnp.concatenate([p["w_pi"], p["w_v"]], axis=1)                 # [core, A+1]
    b_head = jnp.concatenate([p["b_pi"], p["b_v"]], axis=1)                 # [1, A+1]

    # Lane-dense padding: one common width W for core and head outputs.
    W = max(_round_up(core_dim, 128), _round_up(action_dim + 1, 128))
    in_pad = _round_up(obs_dim + fd_dim, 128)

    def pad2(a, rows, cols):
        return jnp.pad(a, ((0, rows - a.shape[0]), (0, cols - a.shape[1])))

    b_pack = jnp.concatenate(
        [pad2(b_x, 1, W), pad2(p["b_c1"], 1, W),
         pad2(p["b_c2"], 1, W), pad2(b_head, 1, W)], axis=0)                # [4, W]
    b_pack = jnp.pad(b_pack, ((0, 4), (0, 0)))                              # [8, W] sublane-aligned

    return dict(
        w_in=pad2(w_in_eff, in_pad, W).astype(bf16),
        w_c1=pad2(p["w_c1"], W, W).astype(bf16),
        w_c2=pad2(p["w_c2"], W, W).astype(bf16),
        w_head=pad2(w_head, W, W).astype(bf16),
        b_pack=b_pack.astype(f32),
        action_dim=action_dim,
        obs_dim=obs_dim,
        fd_dim=fd_dim,
    )


# ---------------------------------------------------------------------------
# Wrapper
# ---------------------------------------------------------------------------
def policy_value_common_net(observation, forward_dynamics_hidden, prep):
    """Fused forward pass. Returns (policy_logits, value)."""
    B = observation.shape[0]
    A = prep["action_dim"]
    in_pad = prep["w_in"].shape[0]
    W = prep["w_head"].shape[1]

    # Batch tiling: single grid point for small batches, 256-row tiles otherwise.
    B_pad = max(8, _round_up(B, 8))
    TB = B_pad if B_pad <= 256 else 256
    B_pad = _round_up(B_pad, TB)

    x = jnp.concatenate([observation, forward_dynamics_hidden], axis=-1)
    x = x.astype(jnp.bfloat16)
    x = jnp.pad(x, ((0, B_pad - B), (0, in_pad - x.shape[1])))

    def weight_spec(a):
        return pl.BlockSpec(a.shape, lambda i: (0, 0))

    head = pl.pallas_call(
        policy_value_kernel,
        out_shape=jax.ShapeDtypeStruct((B_pad, W), jnp.float32),
        grid=(B_pad // TB,),
        in_specs=[
            pl.BlockSpec((TB, in_pad), lambda i: (i, 0)),
            weight_spec(prep["w_in"]),
            weight_spec(prep["w_c1"]),
            weight_spec(prep["w_c2"]),
            weight_spec(prep["w_head"]),
            weight_spec(prep["b_pack"]),
        ],
        out_specs=pl.BlockSpec((TB, W), lambda i: (i, 0)),
        compiler_params=pltpu.CompilerParams(dimension_semantics=("parallel",)),
    )(x, prep["w_in"], prep["w_c1"], prep["w_c2"], prep["w_head"], prep["b_pack"])

    logits = head[:B, :A]
    value = head[:B, A:A + 1]
    return logits, value


# ---------------------------------------------------------------------------
# Synthetic init + references
# ---------------------------------------------------------------------------
def init_params(key, obs_dim, fd_hidden_dim, embed_dim, core_dim, action_dim):
    """Deterministic synthetic parameter init (Linear weights stored [in, out])."""
    keys = jax.random.split(key, 8)

    def linear(k, fan_in, fan_out):
        scale = 1.0 / jnp.sqrt(jnp.float32(fan_in))
        w = jax.random.uniform(k, (fan_in, fan_out), jnp.float32, -scale, scale)
        b = jnp.zeros((1, fan_out), jnp.float32)
        return w, b

    w_op, b_op = linear(keys[0], obs_dim, embed_dim)
    w_hp, b_hp = linear(keys[1], fd_hidden_dim, embed_dim)
    w_cat, b_cat = linear(keys[2], 2 * embed_dim, core_dim)
    w_c1, b_c1 = linear(keys[3], core_dim, core_dim)
    w_c2, b_c2 = linear(keys[4], core_dim, core_dim)
    w_pi, b_pi = linear(keys[5], core_dim, action_dim)
    w_v, b_v = linear(keys[6], core_dim, 1)

    return dict(
        w_op=w_op, b_op=b_op, w_hp=w_hp, b_hp=b_hp, w_cat=w_cat, b_cat=b_cat,
        w_c1=w_c1, b_c1=b_c1, w_c2=w_c2, b_c2=b_c2,
        w_pi=w_pi, b_pi=b_pi, w_v=w_v, b_v=b_v,
    )


def reference_forward(observation, forward_dynamics_hidden, p):
    """Pure-JAX f32 reference mirroring the PyTorch forward semantics."""
    hi = jax.lax.Precision.HIGHEST
    obs_embed = jnp.dot(observation, p["w_op"], precision=hi) + p["b_op"]
    hidden_embed = jnp.dot(forward_dynamics_hidden, p["w_hp"], precision=hi) + p["b_hp"]
    x = jnp.dot(jnp.concatenate([obs_embed, hidden_embed], -1), p["w_cat"], precision=hi) + p["b_cat"]
    h = jax.nn.silu(jnp.dot(x, p["w_c1"], precision=hi) + p["b_c1"])
    h = jax.nn.silu(jnp.dot(h, p["w_c2"], precision=hi) + p["b_c2"])
    logits = jnp.dot(h, p["w_pi"], precision=hi) + p["b_pi"]
    value = jnp.dot(h, p["w_v"], precision=hi) + p["b_v"]
    return logits, value


def prepared_reference_forward(observation, forward_dynamics_hidden, prep):
    """f32 mirror of the exact kernel math on the bf16-quantized, folded params."""
    hi = jax.lax.Precision.HIGHEST
    f32 = jnp.float32
    A = prep["action_dim"]
    in_pad = prep["w_in"].shape[0]

    def bq(a):  # round-trip through bf16, compute in f32
        return a.astype(jnp.bfloat16).astype(f32)

    x = bq(jnp.concatenate([observation, forward_dynamics_hidden], axis=-1))
    x = jnp.pad(x, ((0, 0), (0, in_pad - x.shape[1])))
    w = lambda k: prep[k].astype(f32)
    b = prep["b_pack"]

    x = jnp.dot(x, w("w_in"), precision=hi) + b[0:1]
    h = jax.nn.silu(jnp.dot(bq(x), w("w_c1"), precision=hi) + b[1:2])
    h = jax.nn.silu(jnp.dot(bq(h), w("w_c2"), precision=hi) + b[2:3])
    head = jnp.dot(bq(h), w("w_head"), precision=hi) + b[3:4]
    return head[:, :A], head[:, A:A + 1]


if __name__ == "__main__":
    key = jax.random.PRNGKey(0)
    k_obs, k_hid, k_par = jax.random.split(key, 3)

    B = 2
    OBS_DIM = 32
    FD_HIDDEN_DIM = 16
    EMBED_DIM = 32
    CORE_DIM = 64
    ACTION_DIM = 8

    observation = jax.random.normal(k_obs, (B, OBS_DIM), jnp.float32)
    forward_dynamics_hidden = jax.random.normal(k_hid, (B, FD_HIDDEN_DIM), jnp.float32)
    params = init_params(k_par, OBS_DIM, FD_HIDDEN_DIM, EMBED_DIM, CORE_DIM, ACTION_DIM)

    # One-time param prep (folding / fusing / padding / bf16 cast).
    prep = prepare_params(params, ACTION_DIM)

    # Keep weights resident and fuse concat/padding/slicing by jitting the whole forward.
    forward = jax.jit(lambda o, h: policy_value_common_net(o, h, prep))

    logits, value = forward(observation, forward_dynamics_hidden)
    jax.block_until_ready((logits, value))

    assert logits.shape == (B, ACTION_DIM) and value.shape == (B, 1)

    # Tight check against an f32 mirror of the exact kernel math (bf16-quantized params).
    m_logits, m_value = prepared_reference_forward(observation, forward_dynamics_hidden, prep)
    assert jnp.allclose(logits, m_logits, atol=2e-3, rtol=2e-2)
    assert jnp.allclose(value, m_value, atol=2e-3, rtol=2e-2)

    # Looser check against the original full-f32 module semantics (bf16 quantization error only).
    ref_logits, ref_value = reference_forward(observation, forward_dynamics_hidden, params)
    assert jnp.allclose(logits, ref_logits, atol=3e-2, rtol=3e-2)
    assert jnp.allclose(value, ref_value, atol=3e-2, rtol=3e-2)

    print("KERNEL_OK")
</pallas_src>

<mosaic_0001>
module attributes {stable_mosaic.version = 11 : i64} {
  func.func @policy_value_kernel(%arg0: i32, %arg1: memref<8x128xbf16, #tpu.memory_space<vmem>>, %arg2: memref<128x128xbf16, #tpu.memory_space<vmem>>, %arg3: memref<128x128xbf16, #tpu.memory_space<vmem>>, %arg4: memref<128x128xbf16, #tpu.memory_space<vmem>>, %arg5: memref<128x128xbf16, #tpu.memory_space<vmem>>, %arg6: memref<8x128xf32, #tpu.memory_space<vmem>>, %arg7: memref<8x128xf32, #tpu.memory_space<vmem>>) attributes {dimension_semantics = [#tpu.dimension_semantics<parallel>], iteration_bounds = array<i64: 1>, scalar_prefetch = 0 : i64, scratch_operands = 0 : i64, tpu.core_type = #tpu.core_type<tc>, window_params = [{transform_indices = @transform_0, window_bounds = array<i64: 8, 128>}, {pipeline_mode = #tpu.pipeline_mode<synchronous>, transform_indices = @transform_1, window_bounds = array<i64: 128, 128>}, {pipeline_mode = #tpu.pipeline_mode<synchronous>, transform_indices = @transform_2, window_bounds = array<i64: 128, 128>}, {pipeline_mode = #tpu.pipeline_mode<synchronous>, transform_indices = @transform_3, window_bounds = array<i64: 128, 128>}, {pipeline_mode = #tpu.pipeline_mode<synchronous>, transform_indices = @transform_4, window_bounds = array<i64: 128, 128>}, {pipeline_mode = #tpu.pipeline_mode<synchronous>, transform_indices = @transform_5, window_bounds = array<i64: 8, 128>}, {transform_indices = @transform_6, window_bounds = array<i64: 8, 128>}]} {
    %c0 = arith.constant 0 : index
    %c0_0 = arith.constant 0 : index
    %0 = vector.load %arg6[%c0, %c0_0] : memref<8x128xf32, #tpu.memory_space<vmem>>, vector<8x128xf32>
    %c0_1 = arith.constant 0 : index
    %c0_2 = arith.constant 0 : index
    %1 = vector.load %arg1[%c0_1, %c0_2] : memref<8x128xbf16, #tpu.memory_space<vmem>>, vector<8x128xbf16>
    %c0_3 = arith.constant 0 : index
    %c0_4 = arith.constant 0 : index
    %2 = vector.load %arg2[%c0_3, %c0_4] : memref<128x128xbf16, #tpu.memory_space<vmem>>, vector<128x128xbf16>
    %cst = arith.constant dense<0.000000e+00> : vector<8x128xf32>
    %3 = tpu.matmul %1, %2, %cst {dimension_numbers = #tpu.dot_dimension_numbers<[1], [0], [0], [1], [0, 0, 1, 1], [], []>} : vector<8x128xbf16>, vector<128x128xbf16>, vector<8x128xf32> -> vector<8x128xf32>
    %4 = vector.extract_strided_slice %0 {offsets = [0, 0], sizes = [1, 128], strides = [1, 1]} : vector<8x128xf32> to vector<1x128xf32>
    %5 = vector.broadcast %4 : vector<1x128xf32> to vector<8x128xf32>
    %6 = arith.addf %3, %5 : vector<8x128xf32>
    %7 = arith.truncf %6 : vector<8x128xf32> to vector<8x128xbf16>
    %c0_5 = arith.constant 0 : index
    %c0_6 = arith.constant 0 : index
    %8 = vector.load %arg3[%c0_5, %c0_6] : memref<128x128xbf16, #tpu.memory_space<vmem>>, vector<128x128xbf16>
    %cst_7 = arith.constant dense<0.000000e+00> : vector<8x128xf32>
    %9 = tpu.matmul %7, %8, %cst_7 {dimension_numbers = #tpu.dot_dimension_numbers<[1], [0], [0], [1], [0, 0, 1, 1], [], []>} : vector<8x128xbf16>, vector<128x128xbf16>, vector<8x128xf32> -> vector<8x128xf32>
    %10 = vector.extract_strided_slice %0 {offsets = [1, 0], sizes = [1, 128], strides = [1, 1]} : vector<8x128xf32> to vector<1x128xf32>
    %11 = vector.broadcast %10 : vector<1x128xf32> to vector<8x128xf32>
    %12 = arith.addf %9, %11 : vector<8x128xf32>
    %13 = arith.negf %12 : vector<8x128xf32>
    %14 = math.exp %13 : vector<8x128xf32>
    %cst_8 = arith.constant 1.000000e+00 : f32
    %15 = vector.broadcast %cst_8 : f32 to vector<8x128xf32>
    %16 = arith.addf %15, %14 : vector<8x128xf32>
    %17 = arith.divf %15, %16 : vector<8x128xf32>
    %18 = arith.mulf %12, %17 : vector<8x128xf32>
    %19 = arith.truncf %18 : vector<8x128xf32> to vector<8x128xbf16>
    %c0_9 = arith.constant 0 : index
    %c0_10 = arith.constant 0 : index
    %20 = vector.load %arg4[%c0_9, %c0_10] : memref<128x128xbf16, #tpu.memory_space<vmem>>, vector<128x128xbf16>
    %cst_11 = arith.constant dense<0.000000e+00> : vector<8x128xf32>
    %21 = tpu.matmul %19, %20, %cst_11 {dimension_numbers = #tpu.dot_dimension_numbers<[1], [0], [0], [1], [0, 0, 1, 1], [], []>} : vector<8x128xbf16>, vector<128x128xbf16>, vector<8x128xf32> -> vector<8x128xf32>
    %22 = vector.extract_strided_slice %0 {offsets = [2, 0], sizes = [1, 128], strides = [1, 1]} : vector<8x128xf32> to vector<1x128xf32>
    %23 = vector.broadcast %22 : vector<1x128xf32> to vector<8x128xf32>
    %24 = arith.addf %21, %23 : vector<8x128xf32>
    %25 = arith.negf %24 : vector<8x128xf32>
    %26 = math.exp %25 : vector<8x128xf32>
    %cst_12 = arith.constant 1.000000e+00 : f32
    %27 = vector.broadcast %cst_12 : f32 to vector<8x128xf32>
    %28 = arith.addf %27, %26 : vector<8x128xf32>
    %29 = arith.divf %27, %28 : vector<8x128xf32>
    %30 = arith.mulf %24, %29 : vector<8x128xf32>
    %31 = arith.truncf %30 : vector<8x128xf32> to vector<8x128xbf16>
    %c0_13 = arith.constant 0 : index
    %c0_14 = arith.constant 0 : index
    %32 = vector.load %arg5[%c0_13, %c0_14] : memref<128x128xbf16, #tpu.memory_space<vmem>>, vector<128x128xbf16>
    %cst_15 = arith.constant dense<0.000000e+00> : vector<8x128xf32>
    %33 = tpu.matmul %31, %32, %cst_15 {dimension_numbers = #tpu.dot_dimension_numbers<[1], [0], [0], [1], [0, 0, 1, 1], [], []>} : vector<8x128xbf16>, vector<128x128xbf16>, vector<8x128xf32> -> vector<8x128xf32>
    %34 = vector.extract_strided_slice %0 {offsets = [3, 0], sizes = [1, 128], strides = [1, 1]} : vector<8x128xf32> to vector<1x128xf32>
    %35 = vector.broadcast %34 : vector<1x128xf32> to vector<8x128xf32>
    %36 = arith.addf %33, %35 : vector<8x128xf32>
    %c0_16 = arith.constant 0 : index
    %c0_17 = arith.constant 0 : index
    %37 = vector.load %arg7[%c0_16, %c0_17] : memref<8x128xf32, #tpu.memory_space<vmem>>, vector<8x128xf32>
    tpu.vector_store %arg7[%c0_16, %c0_17], %36 {strides = array<i32>} : memref<8x128xf32, #tpu.memory_space<vmem>>, vector<8x128xf32>,
    return
  }
  func.func @transform_0(%arg0: i32) -> (i32, i32) {
    %c0_i32 = arith.constant 0 : i32
    %c0_i32_0 = arith.constant 0 : i32
    return %arg0, %c0_i32 : i32, i32
  }
  func.func @transform_1(%arg0: i32) -> (i32, i32) {
    %c0_i32 = arith.constant 0 : i32
    %c0_i32_0 = arith.constant 0 : i32
    %c0_i32_1 = arith.constant 0 : i32
    return %c0_i32, %c0_i32_0 : i32, i32
  }
  func.func @transform_2(%arg0: i32) -> (i32, i32) {
    %c0_i32 = arith.constant 0 : i32
    %c0_i32_0 = arith.constant 0 : i32
    %c0_i32_1 = arith.constant 0 : i32
    return %c0_i32, %c0_i32_0 : i32, i32
  }
  func.func @transform_3(%arg0: i32) -> (i32, i32) {
    %c0_i32 = arith.constant 0 : i32
    %c0_i32_0 = arith.constant 0 : i32
    %c0_i32_1 = arith.constant 0 : i32
    return %c0_i32, %c0_i32_0 : i32, i32
  }
  func.func @transform_4(%arg0: i32) -> (i32, i32) {
    %c0_i32 = arith.constant 0 : i32
    %c0_i32_0 = arith.constant 0 : i32
    %c0_i32_1 = arith.constant 0 : i32
    return %c0_i32, %c0_i32_0 : i32, i32
  }
  func.func @transform_5(%arg0: i32) -> (i32, i32) {
    %c0_i32 = arith.constant 0 : i32
    %c0_i32_0 = arith.constant 0 : i32
    %c0_i32_1 = arith.constant 0 : i32
    return %c0_i32, %c0_i32_0 : i32, i32
  }
  func.func @transform_6(%arg0: i32) -> (i32, i32) {
    %c0_i32 = arith.constant 0 : i32
    %c0_i32_0 = arith.constant 0 : i32
    return %arg0, %c0_i32 : i32, i32
  }
}

</mosaic_0001>

<llo_original>
// kernel: _lambda_.1
$region0: #{_lambda_.1}
  #allocation0 [shape = 'u32[]', space=smem, size = 0x4, offset = 0x4, fixed_abs, tag = 'smem constant byte address 0x4 - core index']
  #allocation1 [shape = 'u32[144,128]{1,0:T(1,128)}', space=vmem, size = 0x12000, scoped, tag = 'internal scratch']
  %s0 = inlined_call_operand.vmem [shape: bf16[8,128], index: 0, kind: input, shape index: {}]
  %s1 = inlined_call_operand.hbm [shape: bf16[128,128], index: 1, kind: input, shape index: {}]
  %s2 = inlined_call_operand.hbm [shape: bf16[128,128], index: 2, kind: input, shape index: {}]
  %s3 = inlined_call_operand.hbm [shape: bf16[128,128], index: 3, kind: input, shape index: {}]
  %s4 = inlined_call_operand.hbm [shape: bf16[128,128], index: 4, kind: input, shape index: {}]
  %s5 = inlined_call_operand.vmem [shape: f32[8,128], index: 5, kind: input, shape index: {}]
  %s6 = inlined_call_operand.vmem [shape: f32[8,128], index: 6, kind: output, shape index: {}]
  %s7 = sld [smem:[#allocation0]]
  $region50: #{_lambda_.1} parent=0
    _
  %s9 = ssub.s32 1, %s7
  %s10 = scalar_select 0, %s9, %s7
  $region1: #{_lambda_.1} parent=0
    #allocation2 [shape = 'u8[32768]{0}', space=vmem, size = 0x8000, scoped, tag = 'input window, operand 1, single buffered']
    #allocation3 [shape = 's32[1]{0}', space=sflag, size = 0x4, scoped, tag = 'scoped memory for _lambda_.1']
    #allocation4 [shape = 'u8[32768]{0}', space=vmem, size = 0x8000, scoped, tag = 'input window, operand 2, single buffered']
    #allocation5 [shape = 's32[1]{0}', space=sflag, size = 0x4, scoped, tag = 'scoped memory for _lambda_.1']
    #allocation6 [shape = 'u8[32768]{0}', space=vmem, size = 0x8000, scoped, tag = 'input window, operand 3, single buffered']
    #allocation7 [shape = 'u8[32768]{0}', space=vmem, size = 0x8000, scoped, tag = 'input window, operand 4, single buffered']
    #allocation8 [shape = 's32[1]{0}', space=sflag, size = 0x4, scoped, tag = 'scoped memory for _lambda_.1']
    %11 = vsyncpa [#allocation3], 0
    %12 = vsyncpa [#allocation5], 0
    %13 = vsyncpa [#allocation8], 0
    // Predicated region
    $region2: #{_lambda_.1} parent=1 // pred_check
      _
    $region3: #{_lambda_.1} parent=1 // pred_check_branch
      %15 = sbr.rel (0) target = $region5
    $region4: #{_lambda_.1} parent=1 // pred_region
      _
    $region5: #{_lambda_.1} parent=1 // pred_fallthru
      _
    // Predicated region
    $region6: #{_lambda_.1} parent=1 // pred_check
      _
    $region7: #{_lambda_.1} parent=1 // pred_check_branch
      %17 = sbr.rel (0) target = $region9
    $region8: #{_lambda_.1} parent=1 // pred_region
      %s19 = ssub.s32 1024, 1024
      %20 = vsyncadd [#allocation3], %s19
      %s21 = sshll.u32 [#allocation2], 4
      %s22 = int_to_ptr.vmem [resolvable:$true] %s21
      %27 = dma.hbm_to_vmem [thread:$0]  %s1, 1024, %s22, [#allocation3], 64, 64, 4
    $region9: #{_lambda_.1} parent=1 // pred_fallthru
      _
    // Predicated region
    $region10: #{_lambda_.1} parent=1 // pred_check
      _
    $region11: #{_lambda_.1} parent=1 // pred_check_branch
      %29 = sbr.rel (0) target = $region13
    $region12: #{_lambda_.1} parent=1 // pred_region
      %s31 = ssub.s32 1024, 1024
      %32 = vsyncadd [#allocation5], %s31
      %s33 = sshll.u32 [#allocation4], 4
      %s34 = int_to_ptr.vmem [resolvable:$true] %s33
      %39 = dma.hbm_to_vmem [thread:$0]  %s2, 1024, %s34, [#allocation5], 64, 64, 4
    $region13: #{_lambda_.1} parent=1 // pred_fallthru
      _
    // Predicated region
    $region14: #{_lambda_.1} parent=1 // pred_check
      _
    $region15: #{_lambda_.1} parent=1 // pred_check_branch
      %41 = sbr.rel (0) target = $region17
    $region16: #{_lambda_.1} parent=1 // pred_region
      %s43 = ssub.s32 1024, 1024
      %44 = vsyncadd [#allocation5], %s43
      %s45 = sshll.u32 [#allocation6], 4
      %s46 = int_to_ptr.vmem [resolvable:$true] %s45
      %51 = dma.hbm_to_vmem [thread:$0]  %s3, 1024, %s46, [#allocation5], 64, 64, 4
    $region17: #{_lambda_.1} parent=1 // pred_fallthru
      _
    // Predicated region
    $region18: #{_lambda_.1} parent=1 // pred_check
      _
    $region19: #{_lambda_.1} parent=1 // pred_check_branch
      %53 = sbr.rel (0) target = $region21
    $region20: #{_lambda_.1} parent=1 // pred_region
      %s55 = ssub.s32 1024, 1024
      %56 = vsyncadd [#allocation8], %s55
      %s57 = sshll.u32 [#allocation7], 4
      %s58 = int_to_ptr.vmem [resolvable:$true] %s57
      %63 = dma.hbm_to_vmem [thread:$0]  %s4, 1024, %s58, [#allocation8], 64, 64, 4
    $region21: #{_lambda_.1} parent=1 // pred_fallthru
      _
    // Predicated region
    $region22: #{_lambda_.1} parent=1 // pred_check
      _
    $region23: #{_lambda_.1} parent=1 // pred_check_branch
      %65 = sbr.rel (0) target = $region25
    $region24: #{_lambda_.1} parent=1 // pred_region
      _
    $region25: #{_lambda_.1} parent=1 // pred_fallthru
      _
    // Predicated region
    $region26: #{_lambda_.1} parent=1 // pred_check
      _
    $region27: #{_lambda_.1} parent=1 // pred_check_branch
      %67 = sbr.rel (0) target = $region29
    $region28: #{_lambda_.1} parent=1 // pred_region
      %68 = dma.done [#allocation3], 1024
    $region29: #{_lambda_.1} parent=1 // pred_fallthru
      _
    // Predicated region
    $region30: #{_lambda_.1} parent=1 // pred_check
      _
    $region31: #{_lambda_.1} parent=1 // pred_check_branch
      %70 = sbr.rel (0) target = $region33
    $region32: #{_lambda_.1} parent=1 // pred_region
      %71 = dma.done [#allocation5], 1024
    $region33: #{_lambda_.1} parent=1 // pred_fallthru
      _
    // Predicated region
    $region34: #{_lambda_.1} parent=1 // pred_check
      _
    $region35: #{_lambda_.1} parent=1 // pred_check_branch
      %73 = sbr.rel (0) target = $region37
    $region36: #{_lambda_.1} parent=1 // pred_region
      %74 = dma.done [#allocation5], 1024
    $region37: #{_lambda_.1} parent=1 // pred_fallthru
      _
    // Predicated region
    $region38: #{_lambda_.1} parent=1 // pred_check
      _
    $region39: #{_lambda_.1} parent=1 // pred_check_branch
      %76 = sbr.rel (0) target = $region41
    $region40: #{_lambda_.1} parent=1 // pred_region
      %77 = dma.done [#allocation8], 1024
    $region41: #{_lambda_.1} parent=1 // pred_fallthru
      _
    %v79 = vld [vmem:[%s5] sm:$0xff]
    %v80 = vld [vmem:[%s0] sm:$0xf]
    %v81 = vld [vmem:[#allocation2] sm:$0xf]
    %v82 = vld [vmem:[#allocation2 + $0x4] sm:$0xf]
    %v83 = vld [vmem:[#allocation2 + $0x8] sm:$0xf]
    %v84 = vld [vmem:[#allocation2 + $0xc] sm:$0xf]
    %v85 = vld [vmem:[#allocation2 + $0x10] sm:$0xf]
    %v86 = vld [vmem:[#allocation2 + $0x14] sm:$0xf]
    %v87 = vld [vmem:[#allocation2 + $0x18] sm:$0xf]
    %v88 = vld [vmem:[#allocation2 + $0x1c] sm:$0xf]
    %v89 = vld [vmem:[#allocation2 + $0x20] sm:$0xf]
    %v90 = vld [vmem:[#allocation2 + $0x24] sm:$0xf]
    %v91 = vld [vmem:[#allocation2 + $0x28] sm:$0xf]
    %v92 = vld [vmem:[#allocation2 + $0x2c] sm:$0xf]
    %v93 = vld [vmem:[#allocation2 + $0x30] sm:$0xf]
    %v94 = vld [vmem:[#allocation2 + $0x34] sm:$0xf]
    %v95 = vld [vmem:[#allocation2 + $0x38] sm:$0xf]
    %v96 = vld [vmem:[#allocation2 + $0x3c] sm:$0xf]
    %v97 = vlaneseq
    %v98 = vshrl.u32 %v97, 7
    %v99 = vsub.s32 0, %v98
    %v100 = vrot.slane %v79, %v99
    %v117 = vunpack.c.l.b16 %v81
    %v118 = vunpack.c.l.b16 %v82
    %v119 = vunpack.c.l.b16 %v83
    %v120 = vunpack.c.l.b16 %v84
    %v121 = vunpack.c.l.b16 %v85
    %v122 = vunpack.c.l.b16 %v86
    %v123 = vunpack.c.l.b16 %v87
    %v124 = vunpack.c.l.b16 %v88
    %v125 = vunpack.c.l.b16 %v89
    %v126 = vunpack.c.l.b16 %v90
    %v127 = vunpack.c.l.b16 %v91
    %v128 = vunpack.c.l.b16 %v92
    %v129 = vunpack.c.l.b16 %v93
    %v130 = vunpack.c.l.b16 %v94
    %v131 = vunpack.c.l.b16 %v95
    %v132 = vunpack.c.l.b16 %v96
    %v133 = vpack.c.b16 %v118, %v117
    %v134 = vpack.c.b16 %v120, %v119
    %v135 = vpack.c.b16 %v122, %v121
    %v136 = vpack.c.b16 %v124, %v123
    %v137 = vpack.c.b16 %v126, %v125
    %v138 = vpack.c.b16 %v128, %v127
    %v139 = vpack.c.b16 %v130, %v129
    %v140 = vpack.c.b16 %v132, %v131
    %149 = vmatprep.subr.bf16.mxu0 0
    %150 = vmatpush1.bf16.msra.mxu0 %v133
    %151 = vmatprep.subr.bf16.mxu0 0
    %152 = vmatpush1.bf16.msra.mxu0 %v134
    %153 = vmatprep.subr.bf16.mxu0 0
    %154 = vmatpush1.bf16.msra.mxu0 %v135
    %155 = vmatprep.subr.bf16.mxu0 0
    %156 = vmatpush1.bf16.msra.mxu0 %v136
    %157 = vmatprep.subr.bf16.mxu0 0
    %158 = vmatpush1.bf16.msra.mxu0 %v137
    %159 = vmatprep.subr.bf16.mxu0 0
    %160 = vmatpush1.bf16.msra.mxu0 %v138
    %161 = vmatprep.subr.bf16.mxu0 0
    %162 = vmatpush1.bf16.msra.mxu0 %v139
    %163 = vmatprep.subr.bf16.mxu0 0
    %164 = vmatpush1.bf16.msra.mxu0 %v140
    %165 = vmatprep.subr.bf16.mxu0 0
    %166 = vmatpush1.bf16.msra.mxu0 0
    %167 = vmatprep.subr.bf16.mxu0 0
    %168 = vmatpush1.bf16.msra.mxu0 0
    %169 = vmatprep.subr.bf16.mxu0 0
    %170 = vmatpush1.bf16.msra.mxu0 0
    %171 = vmatprep.subr.bf16.mxu0 0
    %172 = vmatpush1.bf16.msra.mxu0 0
    %173 = vmatprep.subr.bf16.mxu0 0
    %174 = vmatpush1.bf16.msra.mxu0 0
    %175 = vmatprep.subr.bf16.mxu0 0
    %176 = vmatpush1.bf16.msra.mxu0 0
    %177 = vmatprep.subr.bf16.mxu0 0
    %178 = vmatpush1.bf16.msra.mxu0 0
    %179 = vmatprep.subr.bf16.mxu0 0
    %180 = vmatpush1.bf16.msra.mxu0 0
    %181 = vmatprep.mubr.bf16.mxu0 0
    %182 = vmatmul.mubr.bf16.gmra.mrb[0].mxu0 %v80
    %v183 = vpop.f32.mrb[0].mxu0
    %v184 = vadd.f32 %v100, %v183
    %v185 = vpop.f32.mrb[0].mxu0
    %v186 = vpop.f32.mrb[0].mxu0
    %v187 = vpop.f32.mrb[0].mxu0
    %188 = vdwg.mxu0
    %v189 = vpack.c.bf16 %v184, %v184
    %v190 = vld [vmem:[#allocation4] sm:$0xf]
    %v191 = vld [vmem:[#allocation4 + $0x4] sm:$0xf]
    %v192 = vld [vmem:[#allocation4 + $0x8] sm:$0xf]
    %v193 = vld [vmem:[#allocation4 + $0xc] sm:$0xf]
    %v194 = vld [vmem:[#allocation4 + $0x10] sm:$0xf]
    %v195 = vld [vmem:[#allocation4 + $0x14] sm:$0xf]
    %v196 = vld [vmem:[#allocation4 + $0x18] sm:$0xf]
    %v197 = vld [vmem:[#allocation4 + $0x1c] sm:$0xf]
    %v198 = vld [vmem:[#allocation4 + $0x20] sm:$0xf]
    %v199 = vld [vmem:[#allocation4 + $0x24] sm:$0xf]
    %v200 = vld [vmem:[#allocation4 + $0x28] sm:$0xf]
    %v201 = vld [vmem:[#allocation4 + $0x2c] sm:$0xf]
    %v202 = vld [vmem:[#allocation4 + $0x30] sm:$0xf]
    %v203 = vld [vmem:[#allocation4 + $0x34] sm:$0xf]
    %v204 = vld [vmem:[#allocation4 + $0x38] sm:$0xf]
    %v205 = vld [vmem:[#allocation4 + $0x3c] sm:$0xf]
    %v206 = vlaneseq
    %v207 = vshrl.u32 %v206, 7
    %v208 = vsub.s32 1, %v207
    %v209 = vrot.slane %v79, %v208
    %v226 = vunpack.c.l.b16 %v190
    %v227 = vunpack.c.l.b16 %v191
    %v228 = vunpack.c.l.b16 %v192
    %v229 = vunpack.c.l.b16 %v193
    %v230 = vunpack.c.l.b16 %v194
    %v231 = vunpack.c.l.b16 %v195
    %v232 = vunpack.c.l.b16 %v196
    %v233 = vunpack.c.l.b16 %v197
    %v234 = vunpack.c.l.b16 %v198
    %v235 = vunpack.c.l.b16 %v199
    %v236 = vunpack.c.l.b16 %v200
    %v237 = vunpack.c.l.b16 %v201
    %v238 = vunpack.c.l.b16 %v202
    %v239 = vunpack.c.l.b16 %v203
    %v240 = vunpack.c.l.b16 %v204
    %v241 = vunpack.c.l.b16 %v205
    %v242 = vpack.c.b16 %v227, %v226
    %v243 = vpack.c.b16 %v229, %v228
    %v244 = vpack.c.b16 %v231, %v230
    %v245 = vpack.c.b16 %v233, %v232
    %v246 = vpack.c.b16 %v235, %v234
    %v247 = vpack.c.b16 %v237, %v236
    %v248 = vpack.c.b16 %v239, %v238
    %v249 = vpack.c.b16 %v241, %v240
    %258 = vmatprep.subr.bf16.mxu0 0
    %259 = vmatpush1.bf16.msra.mxu0 %v242
    %260 = vmatprep.subr.bf16.mxu0 0
    %261 = vmatpush1.bf16.msra.mxu0 %v243
    %262 = vmatprep.subr.bf16.mxu0 0
    %263 = vmatpush1.bf16.msra.mxu0 %v244
    %264 = vmatprep.subr.bf16.mxu0 0
    %265 = vmatpush1.bf16.msra.mxu0 %v245
    %266 = vmatprep.subr.bf16.mxu0 0
    %267 = vmatpush1.bf16.msra.mxu0 %v246
    %268 = vmatprep.subr.bf16.mxu0 0
    %269 = vmatpush1.bf16.msra.mxu0 %v247
    %270 = vmatprep.subr.bf16.mxu0 0
    %271 = vmatpush1.bf16.msra.mxu0 %v248
    %272 = vmatprep.subr.bf16.mxu0 0
    %273 = vmatpush1.bf16.msra.mxu0 %v249
    %274 = vmatprep.subr.bf16.mxu0 0
    %275 = vmatpush1.bf16.msra.mxu0 0
    %276 = vmatprep.subr.bf16.mxu0 0
    %277 = vmatpush1.bf16.msra.mxu0 0
    %278 = vmatprep.subr.bf16.mxu0 0
    %279 = vmatpush1.bf16.msra.mxu0 0
    %280 = vmatprep.subr.bf16.mxu0 0
    %281 = vmatpush1.bf16.msra.mxu0 0
    %282 = vmatprep.subr.bf16.mxu0 0
    %283 = vmatpush1.bf16.msra.mxu0 0
    %284 = vmatprep.subr.bf16.mxu0 0
    %285 = vmatpush1.bf16.msra.mxu0 0
    %286 = vmatprep.subr.bf16.mxu0 0
    %287 = vmatpush1.bf16.msra.mxu0 0
    %288 = vmatprep.subr.bf16.mxu0 0
    %289 = vmatpush1.bf16.msra.mxu0 0
    %290 = vmatprep.mubr.bf16.mxu0 0
    %291 = vmatmul.mubr.bf16.gmra.mrb[0].mxu0 %v189
    %v292 = vpop.f32.mrb[0].mxu0
    %v293 = vadd.f32 %v209, %v292
    %v294 = vpop.f32.mrb[0].mxu0
    %v295 = vpop.f32.mrb[0].mxu0
    %v296 = vpop.f32.mrb[0].mxu0
    %297 = vdwg.mxu0
    %v298 = vxor.u32 %v293, 2147483648
    %v299 = vmul.f32 %v298, 1.442695
    %v300 = vpow.pop %v299
    %v301 = vadd.f32 %v300, 1.0
    %v302 = vrcp.pop %v301
    %v303 = vmul.f32 1.0, %v302
    %v304 = vmul.f32 %v293, %v303
    %v305 = vpack.c.bf16 %v304, %v304
    %v306 = vld [vmem:[#allocation6] sm:$0xf]
    %v307 = vld [vmem:[#allocation6 + $0x4] sm:$0xf]
    %v308 = vld [vmem:[#allocation6 + $0x8] sm:$0xf]
    %v309 = vld [vmem:[#allocation6 + $0xc] sm:$0xf]
    %v310 = vld [vmem:[#allocation6 + $0x10] sm:$0xf]
    %v311 = vld [vmem:[#allocation6 + $0x14] sm:$0xf]
    %v312 = vld [vmem:[#allocation6 + $0x18] sm:$0xf]
    %v313 = vld [vmem:[#allocation6 + $0x1c] sm:$0xf]
    %v314 = vld [vmem:[#allocation6 + $0x20] sm:$0xf]
    %v315 = vld [vmem:[#allocation6 + $0x24] sm:$0xf]
    %v316 = vld [vmem:[#allocation6 + $0x28] sm:$0xf]
    %v317 = vld [vmem:[#allocation6 + $0x2c] sm:$0xf]
    %v318 = vld [vmem:[#allocation6 + $0x30] sm:$0xf]
    %v319 = vld [vmem:[#allocation6 + $0x34] sm:$0xf]
    %v320 = vld [vmem:[#allocation6 + $0x38] sm:$0xf]
    %v321 = vld [vmem:[#allocation6 + $0x3c] sm:$0xf]
    %v322 = vlaneseq
    %v323 = vshrl.u32 %v322, 7
    %v324 = vsub.s32 2, %v323
    %v325 = vrot.slane %v79, %v324
    %v342 = vunpack.c.l.b16 %v306
    %v343 = vunpack.c.l.b16 %v307
    %v344 = vunpack.c.l.b16 %v308
    %v345 = vunpack.c.l.b16 %v309
    %v346 = vunpack.c.l.b16 %v310
    %v347 = vunpack.c.l.b16 %v311
    %v348 = vunpack.c.l.b16 %v312
    %v349 = vunpack.c.l.b16 %v313
    %v350 = vunpack.c.l.b16 %v314
    %v351 = vunpack.c.l.b16 %v315
    %v352 = vunpack.c.l.b16 %v316
    %v353 = vunpack.c.l.b16 %v317
    %v354 = vunpack.c.l.b16 %v318
    %v355 = vunpack.c.l.b16 %v319
    %v356 = vunpack.c.l.b16 %v320
    %v357 = vunpack.c.l.b16 %v321
    %v358 = vpack.c.b16 %v343, %v342
    %v359 = vpack.c.b16 %v345, %v344
    %v360 = vpack.c.b16 %v347, %v346
    %v361 = vpack.c.b16 %v349, %v348
    %v362 = vpack.c.b16 %v351, %v350
    %v363 = vpack.c.b16 %v353, %v352
    %v364 = vpack.c.b16 %v355, %v354
    %v365 = vpack.c.b16 %v357, %v356
    %374 = vmatprep.subr.bf16.mxu0 0
    %375 = vmatpush1.bf16.msra.mxu0 %v358
    %376 = vmatprep.subr.bf16.mxu0 0
    %377 = vmatpush1.bf16.msra.mxu0 %v359
    %378 = vmatprep.subr.bf16.mxu0 0
    %379 = vmatpush1.bf16.msra.mxu0 %v360
    %380 = vmatprep.subr.bf16.mxu0 0
    %381 = vmatpush1.bf16.msra.mxu0 %v361
    %382 = vmatprep.subr.bf16.mxu0 0
    %383 = vmatpush1.bf16.msra.mxu0 %v362
    %384 = vmatprep.subr.bf16.mxu0 0
    %385 = vmatpush1.bf16.msra.mxu0 %v363
    %386 = vmatprep.subr.bf16.mxu0 0
    %387 = vmatpush1.bf16.msra.mxu0 %v364
    %388 = vmatprep.subr.bf16.mxu0 0
    %389 = vmatpush1.bf16.msra.mxu0 %v365
    %390 = vmatprep.subr.bf16.mxu0 0
    %391 = vmatpush1.bf16.msra.mxu0 0
    %392 = vmatprep.subr.bf16.mxu0 0
    %393 = vmatpush1.bf16.msra.mxu0 0
    %394 = vmatprep.subr.bf16.mxu0 0
    %395 = vmatpush1.bf16.msra.mxu0 0
    %396 = vmatprep.subr.bf16.mxu0 0
    %397 = vmatpush1.bf16.msra.mxu0 0
    %398 = vmatprep.subr.bf16.mxu0 0
    %399 = vmatpush1.bf16.msra.mxu0 0
    %400 = vmatprep.subr.bf16.mxu0 0
    %401 = vmatpush1.bf16.msra.mxu0 0
    %402 = vmatprep.subr.bf16.mxu0 0
    %403 = vmatpush1.bf16.msra.mxu0 0
    %404 = vmatprep.subr.bf16.mxu0 0
    %405 = vmatpush1.bf16.msra.mxu0 0
    %406 = vmatprep.mubr.bf16.mxu0 0
    %407 = vmatmul.mubr.bf16.gmra.mrb[0].mxu0 %v305
    %v408 = vpop.f32.mrb[0].mxu0
    %v409 = vadd.f32 %v325, %v408
    %v410 = vpop.f32.mrb[0].mxu0
    %v411 = vpop.f32.mrb[0].mxu0
    %v412 = vpop.f32.mrb[0].mxu0
    %413 = vdwg.mxu0
    %v414 = vxor.u32 %v409, 2147483648
    %v415 = vmul.f32 %v414, 1.442695
    %v416 = vpow.pop %v415
    %v417 = vadd.f32 %v416, 1.0
    %v418 = vrcp.pop %v417
    %v419 = vmul.f32 1.0, %v418
    %v420 = vmul.f32 %v409, %v419
    %v421 = vpack.c.bf16 %v420, %v420
    %v422 = vld [vmem:[#allocation7] sm:$0xf]
    %v423 = vld [vmem:[#allocation7 + $0x4] sm:$0xf]
    %v424 = vld [vmem:[#allocation7 + $0x8] sm:$0xf]
    %v425 = vld [vmem:[#allocation7 + $0xc] sm:$0xf]
    %v426 = vld [vmem:[#allocation7 + $0x10] sm:$0xf]
    %v427 = vld [vmem:[#allocation7 + $0x14] sm:$0xf]
    %v428 = vld [vmem:[#allocation7 + $0x18] sm:$0xf]
    %v429 = vld [vmem:[#allocation7 + $0x1c] sm:$0xf]
    %v430 = vld [vmem:[#allocation7 + $0x20] sm:$0xf]
    %v431 = vld [vmem:[#allocation7 + $0x24] sm:$0xf]
    %v432 = vld [vmem:[#allocation7 + $0x28] sm:$0xf]
    %v433 = vld [vmem:[#allocation7 + $0x2c] sm:$0xf]
    %v434 = vld [vmem:[#allocation7 + $0x30] sm:$0xf]
    %v435 = vld [vmem:[#allocation7 + $0x34] sm:$0xf]
    %v436 = vld [vmem:[#allocation7 + $0x38] sm:$0xf]
    %v437 = vld [vmem:[#allocation7 + $0x3c] sm:$0xf]
    %v438 = vlaneseq
    %v439 = vshrl.u32 %v438, 7
    %v440 = vsub.s32 3, %v439
    %v441 = vrot.slane %v79, %v440
    %v458 = vunpack.c.l.b16 %v422
    %v459 = vunpack.c.l.b16 %v423
    %v460 = vunpack.c.l.b16 %v424
    %v461 = vunpack.c.l.b16 %v425
    %v462 = vunpack.c.l.b16 %v426
    %v463 = vunpack.c.l.b16 %v427
    %v464 = vunpack.c.l.b16 %v428
    %v465 = vunpack.c.l.b16 %v429
    %v466 = vunpack.c.l.b16 %v430
    %v467 = vunpack.c.l.b16 %v431
    %v468 = vunpack.c.l.b16 %v432
    %v469 = vunpack.c.l.b16 %v433
    %v470 = vunpack.c.l.b16 %v434
    %v471 = vunpack.c.l.b16 %v435
    %v472 = vunpack.c.l.b16 %v436
    %v473 = vunpack.c.l.b16 %v437
    %v474 = vpack.c.b16 %v459, %v458
    %v475 = vpack.c.b16 %v461, %v460
    %v476 = vpack.c.b16 %v463, %v462
    %v477 = vpack.c.b16 %v465, %v464
    %v478 = vpack.c.b16 %v467, %v466
    %v479 = vpack.c.b16 %v469, %v468
    %v480 = vpack.c.b16 %v471, %v470
    %v481 = vpack.c.b16 %v473, %v472
    %490 = vmatprep.subr.bf16.mxu0 0
    %491 = vmatpush1.bf16.msra.mxu0 %v474
    %492 = vmatprep.subr.bf16.mxu0 0
    %493 = vmatpush1.bf16.msra.mxu0 %v475
    %494 = vmatprep.subr.bf16.mxu0 0
    %495 = vmatpush1.bf16.msra.mxu0 %v476
    %496 = vmatprep.subr.bf16.mxu0 0
    %497 = vmatpush1.bf16.msra.mxu0 %v477
    %498 = vmatprep.subr.bf16.mxu0 0
    %499 = vmatpush1.bf16.msra.mxu0 %v478
    %500 = vmatprep.subr.bf16.mxu0 0
    %501 = vmatpush1.bf16.msra.mxu0 %v479
    %502 = vmatprep.subr.bf16.mxu0 0
    %503 = vmatpush1.bf16.msra.mxu0 %v480
    %504 = vmatprep.subr.bf16.mxu0 0
    %505 = vmatpush1.bf16.msra.mxu0 %v481
    %506 = vmatprep.subr.bf16.mxu0 0
    %507 = vmatpush1.bf16.msra.mxu0 0
    %508 = vmatprep.subr.bf16.mxu0 0
    %509 = vmatpush1.bf16.msra.mxu0 0
    %510 = vmatprep.subr.bf16.mxu0 0
    %511 = vmatpush1.bf16.msra.mxu0 0
    %512 = vmatprep.subr.bf16.mxu0 0
    %513 = vmatpush1.bf16.msra.mxu0 0
    %514 = vmatprep.subr.bf16.mxu0 0
    %515 = vmatpush1.bf16.msra.mxu0 0
    %516 = vmatprep.subr.bf16.mxu0 0
    %517 = vmatpush1.bf16.msra.mxu0 0
    %518 = vmatprep.subr.bf16.mxu0 0
    %519 = vmatpush1.bf16.msra.mxu0 0
    %520 = vmatprep.subr.bf16.mxu0 0
    %521 = vmatpush1.bf16.msra.mxu0 0
    %522 = vmatprep.mubr.bf16.mxu0 0
    %523 = vmatmul.mubr.bf16.gmra.mrb[0].mxu0 %v421
    %v524 = vpop.f32.mrb[0].mxu0
    %v525 = vadd.f32 %v441, %v524
    %v526 = vpop.f32.mrb[0].mxu0
    %v527 = vpop.f32.mrb[0].mxu0
    %v528 = vpop.f32.mrb[0].mxu0
    %529 = vdwg.mxu0
    %530 = vst [vmem:[%s6] sm:$0xff] %v525
    // Predicated region
    $region42: #{_lambda_.1} parent=1 // pred_check
      _
    $region43: #{_lambda_.1} parent=1 // pred_check_branch
      %532 = sbr.rel (0) target = $region45
    $region44: #{_lambda_.1} parent=1 // pred_region
      _
    $region45: #{_lambda_.1} parent=1 // pred_fallthru
      _
    // Predicated region
    $region46: #{_lambda_.1} parent=1 // pred_check
      _
    $region47: #{_lambda_.1} parent=1 // pred_check_branch
      %534 = sbr.rel (0) target = $region49
    $region48: #{_lambda_.1} parent=1 // pred_region
      _
    $region49: #{_lambda_.1} parent=1 // pred_fallthru
      _
    %535 = vsyncpa [#allocation3], 1
    %536 = vsyncpa [#allocation5], 1
    %537 = vsyncpa [#allocation8], 1

</llo_original>
